<compile_context>
chip_gen: v6e
topology: v6e:2x2x1
jax: 0.10.0
libtpu: 0.0.40
codegen_flags: <defaults>
</compile_context>

<pallas_src>
import functools

import jax
import jax.numpy as jnp
from jax.experimental import pallas as pl
from jax.experimental.pallas import tpu as pltpu

_LDJ_LANES = 8  # tiny ldj slab: 32 B/row instead of 512 B/row (was 128 lanes)


def _affine_coupling_kernel(num_mid, reverse, compute_dtype,
                            x_ref,
                            w_in_ref, b_in_ref,
                            w_mid_ref, b_mid_ref,
                            w_shift_ref, b_shift_ref,
                            w_ls_ref, b_ls_ref,
                            y_ref, *ldj_refs):
    """One batch tile: interleaved-layout MLP (MXU, f32 accumulation) + affine.

    The coupling split lives in the weights (zero rows / zero cols at the
    untouched positions), so no in-kernel lane shuffles are needed: every
    operand and result stays lane-dense in the natural (tile_b, W)/(tile_b, mid)
    layout.
    """
    x = x_ref[...]                                           # (TB, W) f32
    xc = x.astype(compute_dtype)

    # in_block: Linear(W -> mid); rows of w_in at the transformed positions are
    # zero, so this is exactly off @ w_in + b_in.  ReLU.
    h = jnp.dot(xc, w_in_ref[...],
                preferred_element_type=jnp.float32) + b_in_ref[...]
    h = jnp.maximum(h, 0.0)

    # mid_block: (hidden - 1) x [Linear(mid -> mid) + ReLU], statically unrolled.
    for l in range(num_mid):
        h = jnp.dot(h.astype(compute_dtype), w_mid_ref[l],
                    preferred_element_type=jnp.float32) + b_mid_ref[l]
        h = jnp.maximum(h, 0.0)

    # out_block: shift / log_scale already laid out in interleaved W order
    # (exact zeros at untouched positions).  N = W = 2*half fills the 256-wide
    # MXU on v6e / v7x.
    hc = h.astype(compute_dtype)
    shift = jnp.dot(hc, w_shift_ref[...],
                    preferred_element_type=jnp.float32) + b_shift_ref[...]
    log_scale = jnp.dot(hc, w_ls_ref[...],
                        preferred_element_type=jnp.float32) + b_ls_ref[...]

    if reverse:
        # Untouched positions: shift == 0, log_scale == 0  ->  y == x exactly.
        y_ref[...] = ((x - shift) * jnp.exp(-log_scale)).astype(y_ref.dtype)
        # No ldj output on the reverse path (removes the useless HBM write).
    else:
        y_ref[...] = (x * jnp.exp(log_scale) + shift).astype(y_ref.dtype)
        ldj_ref = ldj_refs[0]
        # Zeros at untouched positions contribute nothing to the row sum.
        row_sum = jnp.sum(log_scale, axis=-1, keepdims=True)      # (TB, 1)
        # TODO(synk): emit this as a transposed (1, tile_b) lane-dense block
        # once the (TB,1)->(1,TB) relayout is validated on all generations;
        # the 8-lane slab already cuts ldj HBM writes to ~1-2% of traffic.
        ldj_ref[...] = jnp.broadcast_to(row_sum, ldj_ref.shape)


def _round_up(x, m):
    return (x + m - 1) // m * m


def _cdiv(a, b):
    return (a + b - 1) // b


def _full_spec(arr):
    """Whole-array block, constant index map -> stays VMEM-resident across grid."""
    ndim = arr.ndim
    return pl.BlockSpec(arr.shape, lambda i, _n=ndim: (0,) * _n)


def _interleave_rows(a, put_at_even):
    """(half, mid) -> (2*half, mid): a's rows at even (or odd) rows, zeros elsewhere."""
    z = jnp.zeros_like(a)
    pair = (a, z) if put_at_even else (z, a)
    return jnp.stack(pair, axis=1).reshape(2 * a.shape[0], a.shape[1])


def _interleave_cols(a, put_at_even):
    """(r, half) -> (r, 2*half): a's cols at even (or odd) cols, zeros elsewhere."""
    z = jnp.zeros_like(a)
    pair = (a, z) if put_at_even else (z, a)
    return jnp.stack(pair, axis=2).reshape(a.shape[0], 2 * a.shape[1])


def _pick_tile(B, compute_dtype, tile_b):
    """Batch tile: big (HBM-roofline friendly), sublane-pack aligned, >=2 steps."""
    pack = max(1, 4 // jnp.dtype(compute_dtype).itemsize)   # f32 -> 1, bf16 -> 2
    sub = 8 * pack
    if tile_b is not None:
        tile_b = max(sub, _round_up(int(tile_b), sub))
        n_tiles = _cdiv(B, tile_b)
        return tile_b, n_tiles
    b_sub = _round_up(B, sub)
    n_tiles = _cdiv(b_sub, 512)                 # 512-row tiles: ~85% of HBM roofline
    if b_sub >= 2 * sub:
        n_tiles = max(n_tiles, 2)               # keep both v7x TensorCores busy
    tile_b = _round_up(_cdiv(b_sub, n_tiles), sub)
    n_tiles = _cdiv(B, tile_b)
    return tile_b, n_tiles


def affine_coupling_forward(x, log_det_J, params, mask_config, reverse=False,
                            compute_dtype=jnp.bfloat16, tile_b=None):
    """JAX wrapper: fold the coupling mask into the weights, run the tiled kernel."""
    B, W = x.shape
    half = W // 2
    w_in, b_in, w_mid, b_mid, w_out, b_out = params
    num_mid = int(w_mid.shape[0])
    mid = int(w_in.shape[1])
    cd = compute_dtype

    # Fold the even/odd coupling split into the parameters (tiny, trace-time
    # XLA ops on weights only; no HBM pass over the activations).
    on_even = bool(mask_config)           # mask_config=1 -> even positions transformed
    w_in_i = _interleave_rows(w_in, put_at_even=not on_even)          # (W, mid)
    w_sh_i = _interleave_cols(w_out[:, :half], put_at_even=on_even)   # (mid, W)
    w_ls_i = _interleave_cols(w_out[:, half:], put_at_even=on_even)   # (mid, W)
    b_sh_i = _interleave_cols(b_out[:, :half], put_at_even=on_even)   # (1, W)
    b_ls_i = _interleave_cols(b_out[:, half:], put_at_even=on_even)   # (1, W)

    # Matmul operands in compute_dtype (bf16 -> ~2x MXU throughput on v6e/v7x);
    # biases, x, the affine math and all accumulation stay f32.
    w_in_c = w_in_i.astype(cd)
    w_sh_c, w_ls_c = w_sh_i.astype(cd), w_ls_i.astype(cd)
    b_in_f = b_in.astype(jnp.float32)
    b_sh_f, b_ls_f = b_sh_i.astype(jnp.float32), b_ls_i.astype(jnp.float32)
    if num_mid > 0:
        w_mid_c = w_mid.astype(cd)
        b_mid_f = b_mid.astype(jnp.float32)
    else:  # dummies so the pallas_call operand list keeps a fixed arity
        w_mid_c = jnp.zeros((1, mid, mid), cd)
        b_mid_f = jnp.zeros((1, 1, mid), jnp.float32)

    tile_b, n_tiles = _pick_tile(B, cd, tile_b)
    B_pad = tile_b * n_tiles
    x_f = x.astype(jnp.float32)
    if B_pad != B:
        # TODO(synk): mask the ragged last tile with pl.when instead of padding.
        x_f = jnp.pad(x_f, ((0, B_pad - B), (0, 0)))
    grid = (n_tiles,)

    kernel = functools.partial(_affine_coupling_kernel, num_mid, bool(reverse), cd)

    weight_ops = (w_in_c, b_in_f, w_mid_c, b_mid_f, w_sh_c, b_sh_f, w_ls_c, b_ls_f)
    in_specs = [pl.BlockSpec((tile_b, W), lambda i: (i, 0))] + \
               [_full_spec(a) for a in weight_ops]

    y_spec = pl.BlockSpec((tile_b, W), lambda i: (i, 0))
    y_shape = jax.ShapeDtypeStruct((B_pad, W), jnp.float32)
    if reverse:
        out_specs = y_spec
        out_shape = y_shape
    else:
        out_specs = (y_spec,
                     pl.BlockSpec((tile_b, _LDJ_LANES), lambda i: (i, 0)))
        out_shape = (y_shape,
                     jax.ShapeDtypeStruct((B_pad, _LDJ_LANES), jnp.float32))

    # VMEM budget from the actual footprint (weights are double-buffered by the
    # default pipelining even with a constant index map).
    weight_bytes = sum(int(a.size) * a.dtype.itemsize for a in weight_ops)
    io_tile_bytes = tile_b * W * 4 * 2 + tile_b * _LDJ_LANES * 4
    interm_bytes = tile_b * (mid + 2 * W) * 4 * 2
    vmem_limit = 2 * (weight_bytes + io_tile_bytes) + interm_bytes + (4 << 20)
    vmem_limit = int(min(max(vmem_limit, 32 << 20), 100 << 20))
    # TODO(synk): for very large mid_dim/hidden on v7x (64 MiB VMEM), stream
    # w_mid per layer over an extra grid axis instead of keeping it resident.

    flops = 2 * B_pad * mid * (3 * W + num_mid * mid)
    bytes_accessed = weight_bytes + B_pad * W * 4 * 2 \
        + (0 if reverse else B_pad * _LDJ_LANES * 4)
    cost = pl.CostEstimate(flops=int(flops),
                           transcendentals=int(B_pad * W),
                           bytes_accessed=int(bytes_accessed))

    result = pl.pallas_call(
        kernel,
        grid=grid,
        in_specs=in_specs,
        out_specs=out_specs,
        out_shape=out_shape,
        compiler_params=pltpu.CompilerParams(
            dimension_semantics=("parallel",),   # shards batch tiles across TCs on v7x
            vmem_limit_bytes=vmem_limit,
        ),
        cost_estimate=cost,
    )(x_f, *weight_ops)

    if reverse:
        y_pad = result
        y = y_pad[:B] if B_pad != B else y_pad
        return y, log_det_J

    y_pad, ldj_slab = result
    y = y_pad[:B] if B_pad != B else y_pad
    ldj_new = log_det_J + ldj_slab[:B, 0]
    return y, ldj_new


def init_params(in_out_dim, mid_dim, hidden, key, scale=0.1):
    """Deterministic synthetic parameters (shapes implied by the module's __init__)."""
    half = in_out_dim // 2
    num_mid = hidden - 1
    k1, k2, k3, k4, k5, k6 = jax.random.split(key, 6)
    w_in = scale * jax.random.normal(k1, (half, mid_dim), jnp.float32)
    b_in = scale * jax.random.normal(k2, (1, mid_dim), jnp.float32)
    w_mid = scale * jax.random.normal(k3, (num_mid, mid_dim, mid_dim), jnp.float32)
    b_mid = scale * jax.random.normal(k4, (num_mid, 1, mid_dim), jnp.float32)
    w_out = scale * jax.random.normal(k5, (mid_dim, in_out_dim), jnp.float32)
    b_out = scale * jax.random.normal(k6, (1, in_out_dim), jnp.float32)
    return (w_in, b_in, w_mid, b_mid, w_out, b_out)


def affine_coupling_reference(x, log_det_J, params, mask_config, reverse=False,
                              compute_dtype=jnp.float32):
    """Pure-JAX reference mirroring the PyTorch module (optionally bf16 matmuls)."""
    B, W = x.shape
    half = W // 2
    w_in, b_in, w_mid, b_mid, w_out, b_out = params
    cd = compute_dtype
    xp = x.reshape(B, half, 2)
    if mask_config:
        on, off = xp[:, :, 0], xp[:, :, 1]
    else:
        off, on = xp[:, :, 0], xp[:, :, 1]
    h = jnp.dot(off.astype(cd), w_in.astype(cd),
                preferred_element_type=jnp.float32) + b_in
    h = jnp.maximum(h, 0.0)
    for l in range(w_mid.shape[0]):
        h = jnp.dot(h.astype(cd), w_mid[l].astype(cd),
                    preferred_element_type=jnp.float32) + b_mid[l]
        h = jnp.maximum(h, 0.0)
    out = jnp.dot(h.astype(cd), w_out.astype(cd),
                  preferred_element_type=jnp.float32) + b_out
    shift, log_scale = out[:, :half], out[:, half:]
    if reverse:
        on = (on - shift) * jnp.exp(-log_scale)
        ldj = log_det_J
    else:
        on = on * jnp.exp(log_scale) + shift
        ldj = log_det_J + jnp.sum(log_scale, axis=-1)
    if mask_config:
        y = jnp.stack((on, off), axis=2)
    else:
        y = jnp.stack((off, on), axis=2)
    return y.reshape(B, W), ldj


if __name__ == "__main__":
    B = 64
    IN_OUT_DIM = 128    # W (even); half = 64
    MID_DIM = 64
    HIDDEN = 3          # -> 2 mid layers
    MASK_CONFIG = 1

    key = jax.random.PRNGKey(0)
    kx, kp = jax.random.split(key)
    x = jax.random.normal(kx, (B, IN_OUT_DIM), jnp.float32)
    log_det_J = jnp.zeros((B,), jnp.float32)
    params = init_params(IN_OUT_DIM, MID_DIM, HIDDEN, kp)

    # f32 compute path: compared against the f32 reference at tight tolerance.
    y32, ldj32 = affine_coupling_forward(x, log_det_J, params, MASK_CONFIG,
                                         reverse=False,
                                         compute_dtype=jnp.float32, tile_b=32)
    y32 = jax.block_until_ready(y32)
    ldj32 = jax.block_until_ready(ldj32)
    y_ref, ldj_ref = affine_coupling_reference(x, log_det_J, params, MASK_CONFIG)
    assert jnp.allclose(y32, y_ref, atol=5e-4, rtol=5e-4), "f32 output mismatch"
    assert jnp.allclose(ldj32, ldj_ref, atol=5e-3, rtol=5e-3), "f32 log_det_J mismatch"

    # reverse (inference) path, f32 (no ldj output from the kernel).
    yr, ldjr = affine_coupling_forward(y_ref, ldj_ref, params, MASK_CONFIG,
                                       reverse=True,
                                       compute_dtype=jnp.float32, tile_b=32)
    yr = jax.block_until_ready(yr)
    yr_ref, ldjr_ref = affine_coupling_reference(y_ref, ldj_ref, params,
                                                 MASK_CONFIG, reverse=True)
    assert jnp.allclose(yr, yr_ref, atol=5e-4, rtol=5e-4), "reverse output mismatch"
    assert jnp.allclose(ldjr, ldjr_ref, atol=1e-6, rtol=1e-6), "reverse ldj mismatch"

    # other mask_config, f32.
    y0, ldj0 = affine_coupling_forward(x, log_det_J, params, 0, reverse=False,
                                       compute_dtype=jnp.float32, tile_b=32)
    y0 = jax.block_until_ready(y0)
    y0_ref, ldj0_ref = affine_coupling_reference(x, log_det_J, params, 0)
    assert jnp.allclose(y0, y0_ref, atol=5e-4, rtol=5e-4), "mask0 output mismatch"
    assert jnp.allclose(ldj0, ldj0_ref, atol=5e-3, rtol=5e-3), "mask0 ldj mismatch"

    # bf16 MXU path (default), auto tile selection; compared vs bf16 reference.
    ybf, ldjbf = affine_coupling_forward(x, log_det_J, params, MASK_CONFIG,
                                         reverse=False,
                                         compute_dtype=jnp.bfloat16)
    ybf = jax.block_until_ready(ybf)
    ldjbf = jax.block_until_ready(ldjbf)
    ybf_ref, ldjbf_ref = affine_coupling_reference(
        x, log_det_J, params, MASK_CONFIG, compute_dtype=jnp.bfloat16)
    assert jnp.allclose(ybf, ybf_ref, atol=2e-2, rtol=2e-2), "bf16 output mismatch"
    assert jnp.allclose(ldjbf, ldjbf_ref, atol=2e-1, rtol=2e-2), "bf16 ldj mismatch"

    print("KERNEL_OK")
</pallas_src>

<mosaic_0001>
module attributes {stable_mosaic.version = 11 : i64} {
  func.func @_affine_coupling_kernel(%arg0: i32, %arg1: memref<32x128xf32, #tpu.memory_space<vmem>>, %arg2: memref<128x64xf32, #tpu.memory_space<vmem>>, %arg3: memref<1x64xf32, #tpu.memory_space<vmem>>, %arg4: memref<2x64x64xf32, #tpu.memory_space<vmem>>, %arg5: memref<2x1x64xf32, #tpu.memory_space<vmem>>, %arg6: memref<64x128xf32, #tpu.memory_space<vmem>>, %arg7: memref<1x128xf32, #tpu.memory_space<vmem>>, %arg8: memref<64x128xf32, #tpu.memory_space<vmem>>, %arg9: memref<1x128xf32, #tpu.memory_space<vmem>>, %arg10: memref<32x128xf32, #tpu.memory_space<vmem>>, %arg11: memref<32x8xf32, #tpu.memory_space<vmem>>) attributes {dimension_semantics = [#tpu.dimension_semantics<parallel>], iteration_bounds = array<i64: 2>, scalar_prefetch = 0 : i64, scratch_operands = 0 : i64, tpu.core_type = #tpu.core_type<tc>, window_params = [{transform_indices = @transform_0, window_bounds = array<i64: 32, 128>}, {pipeline_mode = #tpu.pipeline_mode<synchronous>, transform_indices = @transform_1, window_bounds = array<i64: 128, 64>}, {pipeline_mode = #tpu.pipeline_mode<synchronous>, transform_indices = @transform_2, window_bounds = array<i64: 1, 64>}, {pipeline_mode = #tpu.pipeline_mode<synchronous>, transform_indices = @transform_3, window_bounds = array<i64: 2, 64, 64>}, {pipeline_mode = #tpu.pipeline_mode<synchronous>, transform_indices = @transform_4, window_bounds = array<i64: 2, 1, 64>}, {pipeline_mode = #tpu.pipeline_mode<synchronous>, transform_indices = @transform_5, window_bounds = array<i64: 64, 128>}, {pipeline_mode = #tpu.pipeline_mode<synchronous>, transform_indices = @transform_6, window_bounds = array<i64: 1, 128>}, {pipeline_mode = #tpu.pipeline_mode<synchronous>, transform_indices = @transform_7, window_bounds = array<i64: 64, 128>}, {pipeline_mode = #tpu.pipeline_mode<synchronous>, transform_indices = @transform_8, window_bounds = array<i64: 1, 128>}, {transform_indices = @transform_9, window_bounds = array<i64: 32, 128>}, {transform_indices = @transform_10, window_bounds = array<i64: 32, 8>}]} {
    %c0 = arith.constant 0 : index
    %c0_0 = arith.constant 0 : index
    %0 = vector.load %arg1[%c0, %c0_0] : memref<32x128xf32, #tpu.memory_space<vmem>>, vector<32x128xf32>
    %c0_1 = arith.constant 0 : index
    %c0_2 = arith.constant 0 : index
    %1 = vector.load %arg2[%c0_1, %c0_2] : memref<128x64xf32, #tpu.memory_space<vmem>>, vector<128x64xf32>
    %cst = arith.constant dense<0.000000e+00> : vector<32x64xf32>
    %2 = tpu.matmul %0, %1, %cst {dimension_numbers = #tpu.dot_dimension_numbers<[1], [0], [0], [1], [0, 0, 1, 1], [], []>} : vector<32x128xf32>, vector<128x64xf32>, vector<32x64xf32> -> vector<32x64xf32>
    %c0_3 = arith.constant 0 : index
    %c0_4 = arith.constant 0 : index
    %3 = vector.load %arg3[%c0_3, %c0_4] : memref<1x64xf32, #tpu.memory_space<vmem>>, vector<1x64xf32>
    %4 = vector.broadcast %3 : vector<1x64xf32> to vector<32x64xf32>
    %5 = arith.addf %2, %4 : vector<32x64xf32>
    %cst_5 = arith.constant 0.000000e+00 : f32
    %6 = vector.broadcast %cst_5 : f32 to vector<32x64xf32>
    %7 = arith.maximumf %5, %6 : vector<32x64xf32>
    %c0_6 = arith.constant 0 : index
    %c0_7 = arith.constant 0 : index
    %c0_8 = arith.constant 0 : index
    %8 = vector.load %arg4[%c0_6, %c0_7, %c0_8] : memref<2x64x64xf32, #tpu.memory_space<vmem>>, vector<1x64x64xf32>
    %9 = vector.shape_cast %8 : vector<1x64x64xf32> to vector<64x64xf32>
    %cst_9 = arith.constant dense<0.000000e+00> : vector<32x64xf32>
    %10 = tpu.matmul %7, %9, %cst_9 {dimension_numbers = #tpu.dot_dimension_numbers<[1], [0], [0], [1], [0, 0, 1, 1], [], []>} : vector<32x64xf32>, vector<64x64xf32>, vector<32x64xf32> -> vector<32x64xf32>
    %c0_10 = arith.constant 0 : index
    %c0_11 = arith.constant 0 : index
    %c0_12 = arith.constant 0 : index
    %11 = vector.load %arg5[%c0_10, %c0_11, %c0_12] : memref<2x1x64xf32, #tpu.memory_space<vmem>>, vector<1x1x64xf32>
    %12 = vector.shape_cast %11 : vector<1x1x64xf32> to vector<1x64xf32>
    %13 = vector.broadcast %12 : vector<1x64xf32> to vector<32x64xf32>
    %14 = arith.addf %10, %13 : vector<32x64xf32>
    %cst_13 = arith.constant 0.000000e+00 : f32
    %15 = vector.broadcast %cst_13 : f32 to vector<32x64xf32>
    %16 = arith.maximumf %14, %15 : vector<32x64xf32>
    %c1 = arith.constant 1 : index
    %c0_14 = arith.constant 0 : index
    %c0_15 = arith.constant 0 : index
    %17 = vector.load %arg4[%c1, %c0_14, %c0_15] : memref<2x64x64xf32, #tpu.memory_space<vmem>>, vector<1x64x64xf32>
    %18 = vector.shape_cast %17 : vector<1x64x64xf32> to vector<64x64xf32>
    %cst_16 = arith.constant dense<0.000000e+00> : vector<32x64xf32>
    %19 = tpu.matmul %16, %18, %cst_16 {dimension_numbers = #tpu.dot_dimension_numbers<[1], [0], [0], [1], [0, 0, 1, 1], [], []>} : vector<32x64xf32>, vector<64x64xf32>, vector<32x64xf32> -> vector<32x64xf32>
    %c1_17 = arith.constant 1 : index
    %c0_18 = arith.constant 0 : index
    %c0_19 = arith.constant 0 : index
    %20 = vector.load %arg5[%c1_17, %c0_18, %c0_19] : memref<2x1x64xf32, #tpu.memory_space<vmem>>, vector<1x1x64xf32>
    %21 = vector.shape_cast %20 : vector<1x1x64xf32> to vector<1x64xf32>
    %22 = vector.broadcast %21 : vector<1x64xf32> to vector<32x64xf32>
    %23 = arith.addf %19, %22 : vector<32x64xf32>
    %cst_20 = arith.constant 0.000000e+00 : f32
    %24 = vector.broadcast %cst_20 : f32 to vector<32x64xf32>
    %25 = arith.maximumf %23, %24 : vector<32x64xf32>
    %c0_21 = arith.constant 0 : index
    %c0_22 = arith.constant 0 : index
    %26 = vector.load %arg6[%c0_21, %c0_22] : memref<64x128xf32, #tpu.memory_space<vmem>>, vector<64x128xf32>
    %cst_23 = arith.constant dense<0.000000e+00> : vector<32x128xf32>
    %27 = tpu.matmul %25, %26, %cst_23 {dimension_numbers = #tpu.dot_dimension_numbers<[1], [0], [0], [1], [0, 0, 1, 1], [], []>} : vector<32x64xf32>, vector<64x128xf32>, vector<32x128xf32> -> vector<32x128xf32>
    %c0_24 = arith.constant 0 : index
    %c0_25 = arith.constant 0 : index
    %28 = vector.load %arg7[%c0_24, %c0_25] : memref<1x128xf32, #tpu.memory_space<vmem>>, vector<1x128xf32>
    %29 = vector.broadcast %28 : vector<1x128xf32> to vector<32x128xf32>
    %30 = arith.addf %27, %29 : vector<32x128xf32>
    %c0_26 = arith.constant 0 : index
    %c0_27 = arith.constant 0 : index
    %31 = vector.load %arg8[%c0_26, %c0_27] : memref<64x128xf32, #tpu.memory_space<vmem>>, vector<64x128xf32>
    %cst_28 = arith.constant dense<0.000000e+00> : vector<32x128xf32>
    %32 = tpu.matmul %25, %31, %cst_28 {dimension_numbers = #tpu.dot_dimension_numbers<[1], [0], [0], [1], [0, 0, 1, 1], [], []>} : vector<32x64xf32>, vector<64x128xf32>, vector<32x128xf32> -> vector<32x128xf32>
    %c0_29 = arith.constant 0 : index
    %c0_30 = arith.constant 0 : index
    %33 = vector.load %arg9[%c0_29, %c0_30] : memref<1x128xf32, #tpu.memory_space<vmem>>, vector<1x128xf32>
    %34 = vector.broadcast %33 : vector<1x128xf32> to vector<32x128xf32>
    %35 = arith.addf %32, %34 : vector<32x128xf32>
    %36 = math.exp %35 : vector<32x128xf32>
    %37 = arith.mulf %0, %36 : vector<32x128xf32>
    %38 = arith.addf %37, %30 : vector<32x128xf32>
    %c0_31 = arith.constant 0 : index
    %c0_32 = arith.constant 0 : index
    %39 = vector.load %arg10[%c0_31, %c0_32] : memref<32x128xf32, #tpu.memory_space<vmem>>, vector<32x128xf32>
    tpu.vector_store %arg10[%c0_31, %c0_32], %38 {strides = array<i32>} : memref<32x128xf32, #tpu.memory_space<vmem>>, vector<32x128xf32>,
    %cst_33 = arith.constant dense<0.000000e+00> : vector<32xf32>
    %40 = vector.multi_reduction <add>, %35, %cst_33 [1] : vector<32x128xf32> to vector<32xf32>
    %41 = vector.shape_cast %40 : vector<32xf32> to vector<32x1xf32>
    %42 = vector.shape_cast %41 : vector<32x1xf32> to vector<32x1xf32>
    %43 = vector.broadcast %42 : vector<32x1xf32> to vector<32x8xf32>
    %c0_34 = arith.constant 0 : index
    %c0_35 = arith.constant 0 : index
    %44 = vector.load %arg11[%c0_34, %c0_35] : memref<32x8xf32, #tpu.memory_space<vmem>>, vector<32x8xf32>
    tpu.vector_store %arg11[%c0_34, %c0_35], %43 {strides = array<i32>} : memref<32x8xf32, #tpu.memory_space<vmem>>, vector<32x8xf32>,
    return
  }
  func.func @transform_0(%arg0: i32) -> (i32, i32) {
    %c0_i32 = arith.constant 0 : i32
    %c0_i32_0 = arith.constant 0 : i32
    return %arg0, %c0_i32 : i32, i32
  }
  func.func @transform_1(%arg0: i32) -> (i32, i32) {
    %c0_i32 = arith.constant 0 : i32
    %c0_i32_0 = arith.constant 0 : i32
    %c0_i32_1 = arith.constant 0 : i32
    return %c0_i32, %c0_i32_0 : i32, i32
  }
  func.func @transform_2(%arg0: i32) -> (i32, i32) {
    %c0_i32 = arith.constant 0 : i32
    %c0_i32_0 = arith.constant 0 : i32
    %c0_i32_1 = arith.constant 0 : i32
    return %c0_i32, %c0_i32_0 : i32, i32
  }
  func.func @transform_3(%arg0: i32) -> (i32, i32, i32) {
    %c0_i32 = arith.constant 0 : i32
    %c0_i32_0 = arith.constant 0 : i32
    %c0_i32_1 = arith.constant 0 : i32
    %c0_i32_2 = arith.constant 0 : i32
    return %c0_i32, %c0_i32_0, %c0_i32_1 : i32, i32, i32
  }
  func.func @transform_4(%arg0: i32) -> (i32, i32, i32) {
    %c0_i32 = arith.constant 0 : i32
    %c0_i32_0 = arith.constant 0 : i32
    %c0_i32_1 = arith.constant 0 : i32
    %c0_i32_2 = arith.constant 0 : i32
    return %c0_i32, %c0_i32_0, %c0_i32_1 : i32, i32, i32
  }
  func.func @transform_5(%arg0: i32) -> (i32, i32) {
    %c0_i32 = arith.constant 0 : i32
    %c0_i32_0 = arith.constant 0 : i32
    %c0_i32_1 = arith.constant 0 : i32
    return %c0_i32, %c0_i32_0 : i32, i32
  }
  func.func @transform_6(%arg0: i32) -> (i32, i32) {
    %c0_i32 = arith.constant 0 : i32
    %c0_i32_0 = arith.constant 0 : i32
    %c0_i32_1 = arith.constant 0 : i32
    return %c0_i32, %c0_i32_0 : i32, i32
  }
  func.func @transform_7(%arg0: i32) -> (i32, i32) {
    %c0_i32 = arith.constant 0 : i32
    %c0_i32_0 = arith.constant 0 : i32
    %c0_i32_1 = arith.constant 0 : i32
    return %c0_i32, %c0_i32_0 : i32, i32
  }
  func.func @transform_8(%arg0: i32) -> (i32, i32) {
    %c0_i32 = arith.constant 0 : i32
    %c0_i32_0 = arith.constant 0 : i32
    %c0_i32_1 = arith.constant 0 : i32
    return %c0_i32, %c0_i32_0 : i32, i32
  }
  func.func @transform_9(%arg0: i32) -> (i32, i32) {
    %c0_i32 = arith.constant 0 : i32
    %c0_i32_0 = arith.constant 0 : i32
    return %arg0, %c0_i32 : i32, i32
  }
  func.func @transform_10(%arg0: i32) -> (i32, i32) {
    %c0_i32 = arith.constant 0 : i32
    %c0_i32_0 = arith.constant 0 : i32
    return %arg0, %c0_i32 : i32, i32
  }
}

</mosaic_0001>

<llo_original>
// kernel: tpu_custom_call.1
$region0: #{tpu_custom_call.1}
  #allocation0 [shape = 'u32[]', space=smem, size = 0x4, offset = 0x4, fixed_abs, tag = 'smem constant byte address 0x4 - core index']
  #allocation1 [shape = 'u32[144,128]{1,0:T(1,128)}', space=vmem, size = 0x12000, scoped, tag = 'internal scratch']
  %s0 = inlined_call_operand.vmem [shape: f32[64,128], index: 0, kind: input, shape index: {}]
  %s1 = inlined_call_operand.vmem [shape: f32[128,64], index: 1, kind: input, shape index: {}]
  %s2 = inlined_call_operand.vmem [shape: f32[1,64], index: 2, kind: input, shape index: {}]
  %s3 = inlined_call_operand.vmem [shape: f32[2,64,64], index: 3, kind: input, shape index: {}]
  %s4 = inlined_call_operand.vmem [shape: f32[2,1,64], index: 4, kind: input, shape index: {}]
  %s5 = inlined_call_operand.hbm [shape: f32[64,128], index: 5, kind: input, shape index: {}]
  %s6 = inlined_call_operand.vmem [shape: f32[1,128], index: 6, kind: input, shape index: {}]
  %s7 = inlined_call_operand.hbm [shape: f32[64,128], index: 7, kind: input, shape index: {}]
  %s8 = inlined_call_operand.vmem [shape: f32[1,128], index: 8, kind: input, shape index: {}]
  %s9 = inlined_call_operand.hbm [shape: f32[64,128], index: 9, kind: output, shape index: {0}]
  %s10 = inlined_call_operand.vmem [shape: f32[64,8], index: 10, kind: output, shape index: {1}]
  %11 = xla_tuple %s9, %s10
  %s12 = sld [smem:[#allocation0]]
  $region85: #{tpu_custom_call.1} parent=0
    _
  %s14 = ssub.s32 1, %s12
  %s15 = scalar_select 0, %s14, %s12
  $region1: #{tpu_custom_call.1} parent=0
    #allocation2 [shape = 'u8[32768]{0}', space=vmem, size = 0x8000, scoped, tag = 'input window, operand 5, single buffered']
    #allocation3 [shape = 's32[2]{0}', space=sflag, size = 0x8, scoped, tag = 'scoped memory for tpu_custom_call.1']
    #allocation4 [shape = 's32[2]{0}', space=sflag, size = 0x8, scoped, tag = 'scoped memory for tpu_custom_call.1']
    #allocation5 [shape = 'u8[32768]{0}', space=vmem, size = 0x8000, scoped, tag = 'input window, operand 7, single buffered']
    #allocation6 [shape = 's32[1]{0}', space=sflag, size = 0x4, scoped, tag = 'scoped memory for tpu_custom_call.1']
    #allocation7 [shape = 'u8[32768]{0}', space=vmem, size = 0x8000, scoped, tag = 'output window, operand 0']
    %16 = vsyncpa [#allocation3], 0
    %17 = vsyncpa [#allocation6], 0
    %18 = vsyncpa [#allocation4], 0
    %s19 = scalar_lea.sflag [#allocation4], 1
    %20 = vsyncpa %s19, 0
    loop: start=0, step=1, limit=4
    $region2: #{tpu_custom_call.1} parent=1 // loop_pre_header
      _
    $region3: #{tpu_custom_call.1} parent=1 // loop_header
      %s22 = sphi 0, %s26
      %p23 = scmp.ge.s32.totalorder %s22, 4
      %s32 = sphi 0, %s34
      %s35 = sphi 0, %s32
      %s36 = sphi 0, %s35
      %s52 = sphi 0, %s36
      %s56 = sphi 0, %s56
      %s58 = sphi 0, %s56
      %s59 = sphi 0, %s58
      %s73 = sphi 0, %s59
      %s77 = sphi 0, %s77
      %s79 = sphi 0, %s77
      %s80 = sphi 0, %s79
      %s94 = sphi 0, %s80
      %s98 = sphi 0, %s98
      %s100 = sphi 0, %s98
      %s101 = sphi 0, %s100
      %s115 = sphi 0, %s101
      %s119 = sphi 0, %s119
      %s121 = sphi 0, %s119
      %s122 = sphi 0, %s121
      %s136 = sphi 0, %s122
      %s140 = sphi 0, %s140
      %s142 = sphi 0, %s140
      %s143 = sphi 0, %s142
      %s157 = sphi 0, %s143
      %s161 = sphi 0, %s161
      %s163 = sphi 0, %s161
      %s164 = sphi 0, %s163
      %s178 = sphi 0, %s164
      %s182 = sphi 0, %s182
      %s184 = sphi 0, %s182
      %s185 = sphi 0, %s184
      %s199 = sphi 0, %s185
      %s203 = sphi 0, %s203
      %s205 = sphi 0, %s203
      %s206 = sphi 0, %s205
      %s220 = sphi 0, %s206
      %s226 = sphi 0, %s228
      %s229 = sphi 0, %s226
      %s230 = sphi 0, %s229
      %s246 = sphi 0, %s230
      %s252 = sphi 0, %s254
      %s255 = sphi 0, %s252
      %s256 = sphi 0, %s255
      %s272 = sphi 0, %s256
    $region4: #{tpu_custom_call.1} parent=1 // loop_header_branch
      %25 = sbr.rel (%p23) target = $region8
    $region5: #{tpu_custom_call.1} parent=1 // loop_body
      %s27 = ssub.s32 %s22, 1
      %s28 = ssub.s32 %s22, 2
      %s29 = sadd.s32 %s22, 1
      %s30 = ssub.s32 %s22, %s29
      %p31 = scmp.eq.s32.totalorder %s30, 0
      %s33 = sadd.s32 %s32, 1
      %s34 = scalar_select %p31, %s32, %s33
      %p37 = pneg %p31
      %p38 = scmp.eq.s32.totalorder %s22, 1
      %p39 = por %p37, %p38
      %p40 = scmp.ne.s32.totalorder %s32, %s35
      %p41 = scmp.eq.s32.totalorder %s22, 0
      %p42 = por %p40, %p41
      %p43 = scmp.ne.s32.totalorder %s32, %s35
      %p44 = scmp.eq.s32.totalorder %s27, 1
      %p45 = por %p43, %p44
      %p46 = scmp.ne.s32.totalorder %s35, %s36
      %p47 = scmp.eq.s32.totalorder %s27, 0
      %p48 = por %p46, %p47
      %p49 = scmp.ne.s32.totalorder %s35, %s36
      %p50 = scmp.eq.s32.totalorder %s28, 1
      %p51 = por %p49, %p50
      %p53 = scmp.ne.s32.totalorder %s36, %s52
      %p54 = scmp.eq.s32.totalorder %s28, 0
      %p55 = por %p53, %p54
      %s57 = sadd.s32 %s56, 1
      %p60 = scmp.eq.s32.totalorder %s22, 1
      %p61 = scmp.ne.s32.totalorder %s56, %s58
      %p62 = scmp.eq.s32.totalorder %s22, 0
      %p63 = por %p61, %p62
      %p64 = scmp.ne.s32.totalorder %s56, %s58
      %p65 = scmp.eq.s32.totalorder %s27, 1
      %p66 = por %p64, %p65
      %p67 = scmp.ne.s32.totalorder %s58, %s59
      %p68 = scmp.eq.s32.totalorder %s27, 0
      %p69 = por %p67, %p68
      %p70 = scmp.ne.s32.totalorder %s58, %s59
      %p71 = scmp.eq.s32.totalorder %s28, 1
      %p72 = por %p70, %p71
      %p74 = scmp.ne.s32.totalorder %s59, %s73
      %p75 = scmp.eq.s32.totalorder %s28, 0
      %p76 = por %p74, %p75
      %s78 = sadd.s32 %s77, 1
      %p81 = scmp.eq.s32.totalorder %s22, 1
      %p82 = scmp.ne.s32.totalorder %s77, %s79
      %p83 = scmp.eq.s32.totalorder %s22, 0
      %p84 = por %p82, %p83
      %p85 = scmp.ne.s32.totalorder %s77, %s79
      %p86 = scmp.eq.s32.totalorder %s27, 1
      %p87 = por %p85, %p86
      %p88 = scmp.ne.s32.totalorder %s79, %s80
      %p89 = scmp.eq.s32.totalorder %s27, 0
      %p90 = por %p88, %p89
      %p91 = scmp.ne.s32.totalorder %s79, %s80
      %p92 = scmp.eq.s32.totalorder %s28, 1
      %p93 = por %p91, %p92
      %p95 = scmp.ne.s32.totalorder %s80, %s94
      %p96 = scmp.eq.s32.totalorder %s28, 0
      %p97 = por %p95, %p96
      %s99 = sadd.s32 %s98, 1
      %p102 = scmp.eq.s32.totalorder %s22, 1
      %p103 = scmp.ne.s32.totalorder %s98, %s100
      %p104 = scmp.eq.s32.totalorder %s22, 0
      %p105 = por %p103, %p104
      %p106 = scmp.ne.s32.totalorder %s98, %s100
      %p107 = scmp.eq.s32.totalorder %s27, 1
      %p108 = por %p106, %p107
      %p109 = scmp.ne.s32.totalorder %s100, %s101
      %p110 = scmp.eq.s32.totalorder %s27, 0
      %p111 = por %p109, %p110
      %p112 = scmp.ne.s32.totalorder %s100, %s101
      %p113 = scmp.eq.s32.totalorder %s28, 1
      %p114 = por %p112, %p113
      %p116 = scmp.ne.s32.totalorder %s101, %s115
      %p117 = scmp.eq.s32.totalorder %s28, 0
      %p118 = por %p116, %p117
      %s120 = sadd.s32 %s119, 1
      %p123 = scmp.eq.s32.totalorder %s22, 1
      %p124 = scmp.ne.s32.totalorder %s119, %s121
      %p125 = scmp.eq.s32.totalorder %s22, 0
      %p126 = por %p124, %p125
      %p127 = scmp.ne.s32.totalorder %s119, %s121
      %p128 = scmp.eq.s32.totalorder %s27, 1
      %p129 = por %p127, %p128
      %p130 = scmp.ne.s32.totalorder %s121, %s122
      %p131 = scmp.eq.s32.totalorder %s27, 0
      %p132 = por %p130, %p131
      %p133 = scmp.ne.s32.totalorder %s121, %s122
      %p134 = scmp.eq.s32.totalorder %s28, 1
      %p135 = por %p133, %p134
      %p137 = scmp.ne.s32.totalorder %s122, %s136
      %p138 = scmp.eq.s32.totalorder %s28, 0
      %p139 = por %p137, %p138
      %s141 = sadd.s32 %s140, 1
      %p144 = scmp.eq.s32.totalorder %s22, 1
      %p145 = scmp.ne.s32.totalorder %s140, %s142
      %p146 = scmp.eq.s32.totalorder %s22, 0
      %p147 = por %p145, %p146
      %p148 = scmp.ne.s32.totalorder %s140, %s142
      %p149 = scmp.eq.s32.totalorder %s27, 1
      %p150 = por %p148, %p149
      %p151 = scmp.ne.s32.totalorder %s142, %s143
      %p152 = scmp.eq.s32.totalorder %s27, 0
      %p153 = por %p151, %p152
      %p154 = scmp.ne.s32.totalorder %s142, %s143
      %p155 = scmp.eq.s32.totalorder %s28, 1
      %p156 = por %p154, %p155
      %p158 = scmp.ne.s32.totalorder %s143, %s157
      %p159 = scmp.eq.s32.totalorder %s28, 0
      %p160 = por %p158, %p159
      %s162 = sadd.s32 %s161, 1
      %p165 = scmp.eq.s32.totalorder %s22, 1
      %p166 = scmp.ne.s32.totalorder %s161, %s163
      %p167 = scmp.eq.s32.totalorder %s22, 0
      %p168 = por %p166, %p167
      %p169 = scmp.ne.s32.totalorder %s161, %s163
      %p170 = scmp.eq.s32.totalorder %s27, 1
      %p171 = por %p169, %p170
      %p172 = scmp.ne.s32.totalorder %s163, %s164
      %p173 = scmp.eq.s32.totalorder %s27, 0
      %p174 = por %p172, %p173
      %p175 = scmp.ne.s32.totalorder %s163, %s164
      %p176 = scmp.eq.s32.totalorder %s28, 1
      %p177 = por %p175, %p176
      %p179 = scmp.ne.s32.totalorder %s164, %s178
      %p180 = scmp.eq.s32.totalorder %s28, 0
      %p181 = por %p179, %p180
      %s183 = sadd.s32 %s182, 1
      %p186 = scmp.eq.s32.totalorder %s22, 1
      %p187 = scmp.ne.s32.totalorder %s182, %s184
      %p188 = scmp.eq.s32.totalorder %s22, 0
      %p189 = por %p187, %p188
      %p190 = scmp.ne.s32.totalorder %s182, %s184
      %p191 = scmp.eq.s32.totalorder %s27, 1
      %p192 = por %p190, %p191
      %p193 = scmp.ne.s32.totalorder %s184, %s185
      %p194 = scmp.eq.s32.totalorder %s27, 0
      %p195 = por %p193, %p194
      %p196 = scmp.ne.s32.totalorder %s184, %s185
      %p197 = scmp.eq.s32.totalorder %s28, 1
      %p198 = por %p196, %p197
      %p200 = scmp.ne.s32.totalorder %s185, %s199
      %p201 = scmp.eq.s32.totalorder %s28, 0
      %p202 = por %p200, %p201
      %s204 = sadd.s32 %s203, 1
      %p207 = scmp.eq.s32.totalorder %s22, 1
      %p208 = scmp.ne.s32.totalorder %s203, %s205
      %p209 = scmp.eq.s32.totalorder %s22, 0
      %p210 = por %p208, %p209
      %p211 = scmp.ne.s32.totalorder %s203, %s205
      %p212 = scmp.eq.s32.totalorder %s27, 1
      %p213 = por %p211, %p212
      %p214 = scmp.ne.s32.totalorder %s205, %s206
      %p215 = scmp.eq.s32.totalorder %s27, 0
      %p216 = por %p214, %p215
      %p217 = scmp.ne.s32.totalorder %s205, %s206
      %p218 = scmp.eq.s32.totalorder %s28, 1
      %p219 = por %p217, %p218
      %p221 = scmp.ne.s32.totalorder %s206, %s220
      %p222 = scmp.eq.s32.totalorder %s28, 0
      %p223 = por %p221, %p222
      %s224 = ssub.s32 %s22, %s29
      %p225 = scmp.eq.s32.totalorder %s224, 0
      %s227 = sadd.s32 %s226, 1
      %s228 = scalar_select %p225, %s226, %s227
      %p231 = pneg %p225
      %p232 = scmp.eq.s32.totalorder %s22, 1
      %p233 = por %p231, %p232
      %p234 = scmp.ne.s32.totalorder %s226, %s229
      %p235 = scmp.eq.s32.totalorder %s22, 0
      %p236 = por %p234, %p235
      %p237 = scmp.ne.s32.totalorder %s226, %s229
      %p238 = scmp.eq.s32.totalorder %s27, 1
      %p239 = por %p237, %p238
      %p240 = scmp.ne.s32.totalorder %s229, %s230
      %p241 = scmp.eq.s32.totalorder %s27, 0
      %p242 = por %p240, %p241
      %p243 = scmp.ne.s32.totalorder %s229, %s230
      %p244 = scmp.eq.s32.totalorder %s28, 1
      %p245 = por %p243, %p244
      %p247 = scmp.ne.s32.totalorder %s230, %s246
      %p248 = scmp.eq.s32.totalorder %s28, 0
      %p249 = por %p247, %p248
      %s250 = ssub.s32 %s22, %s29
      %p251 = scmp.eq.s32.totalorder %s250, 0
      %s253 = sadd.s32 %s252, 1
      %s254 = scalar_select %p251, %s252, %s253
      %p257 = pneg %p251
      %p258 = scmp.eq.s32.totalorder %s22, 1
      %p259 = por %p257, %p258
      %p260 = scmp.ne.s32.totalorder %s252, %s255
      %p261 = scmp.eq.s32.totalorder %s22, 0
      %p262 = por %p260, %p261
      %p263 = scmp.ne.s32.totalorder %s252, %s255
      %p264 = scmp.eq.s32.totalorder %s27, 1
      %p265 = por %p263, %p264
      %p266 = scmp.ne.s32.totalorder %s255, %s256
      %p267 = scmp.eq.s32.totalorder %s27, 0
      %p268 = por %p266, %p267
      %p269 = scmp.ne.s32.totalorder %s255, %s256
      %p270 = scmp.eq.s32.totalorder %s28, 1
      %p271 = por %p269, %p270
      %p273 = scmp.ne.s32.totalorder %s256, %s272
      %p274 = scmp.eq.s32.totalorder %s28, 0
      %p275 = por %p273, %p274
      %p276 = scmp.le.s32.totalorder 1, %s22
      %p277 = scmp.lt.s32.totalorder %s22, 3
      %p278 = pnand %p276, %p277
      %p279 = pneg %p278
      // Predicated region
      $region9: #{tpu_custom_call.1} parent=5 // pred_check
        _
      $region10: #{tpu_custom_call.1} parent=5 // pred_check_branch
        %281 = sbr.rel (%p278) target = $region12
      $region11: #{tpu_custom_call.1} parent=5 // pred_region
        %s282 = ssub.s32 %s22, 1
        // Predicated region
        $region13: #{tpu_custom_call.1} parent=11 // pred_check
          %p283 = pneg %p69
        $region14: #{tpu_custom_call.1} parent=11 // pred_check_branch
          %285 = sbr.rel (%p283) target = $region16
        $region15: #{tpu_custom_call.1} parent=11 // pred_region
          _
        $region16: #{tpu_custom_call.1} parent=11 // pred_fallthru
          _
        // Predicated region
        $region17: #{tpu_custom_call.1} parent=11 // pred_check
          %p286 = pneg %p90
        $region18: #{tpu_custom_call.1} parent=11 // pred_check_branch
          %288 = sbr.rel (%p286) target = $region20
        $region19: #{tpu_custom_call.1} parent=11 // pred_region
          _
        $region20: #{tpu_custom_call.1} parent=11 // pred_fallthru
          _
        // Predicated region
        $region21: #{tpu_custom_call.1} parent=11 // pred_check
          %p289 = pneg %p111
        $region22: #{tpu_custom_call.1} parent=11 // pred_check_branch
          %291 = sbr.rel (%p289) target = $region24
        $region23: #{tpu_custom_call.1} parent=11 // pred_region
          _
        $region24: #{tpu_custom_call.1} parent=11 // pred_fallthru
          _
        // Predicated region
        $region25: #{tpu_custom_call.1} parent=11 // pred_check
          %p292 = pneg %p132
        $region26: #{tpu_custom_call.1} parent=11 // pred_check_branch
          %294 = sbr.rel (%p292) target = $region28
        $region27: #{tpu_custom_call.1} parent=11 // pred_region
          _
        $region28: #{tpu_custom_call.1} parent=11 // pred_fallthru
          _
        // Predicated region
        $region29: #{tpu_custom_call.1} parent=11 // pred_check
          %p295 = pneg %p153
        $region30: #{tpu_custom_call.1} parent=11 // pred_check_branch
          %297 = sbr.rel (%p295) target = $region32
        $region31: #{tpu_custom_call.1} parent=11 // pred_region
          %s299 = ssub.s32 1024, 1024
          %300 = vsyncadd [#allocation3], %s299
          %s301 = sshll.u32 [#allocation2], 4
          %s302 = int_to_ptr.vmem [resolvable:$true] %s301
          %307 = dma.hbm_to_vmem [thread:$0]  %s5, 1024, %s302, [#allocation3], 128, 128, 8
        $region32: #{tpu_custom_call.1} parent=11 // pred_fallthru
          _
        // Predicated region
        $region33: #{tpu_custom_call.1} parent=11 // pred_check
          %p308 = pneg %p174
        $region34: #{tpu_custom_call.1} parent=11 // pred_check_branch
          %310 = sbr.rel (%p308) target = $region36
        $region35: #{tpu_custom_call.1} parent=11 // pred_region
          _
        $region36: #{tpu_custom_call.1} parent=11 // pred_fallthru
          _
        // Predicated region
        $region37: #{tpu_custom_call.1} parent=11 // pred_check
          %p311 = pneg %p195
        $region38: #{tpu_custom_call.1} parent=11 // pred_check_branch
          %313 = sbr.rel (%p311) target = $region40
        $region39: #{tpu_custom_call.1} parent=11 // pred_region
          %s315 = ssub.s32 1024, 1024
          %316 = vsyncadd [#allocation6], %s315
          %s317 = sshll.u32 [#allocation5], 4
          %s318 = int_to_ptr.vmem [resolvable:$true] %s317
          %323 = dma.hbm_to_vmem [thread:$0]  %s7, 1024, %s318, [#allocation6], 128, 128, 8
        $region40: #{tpu_custom_call.1} parent=11 // pred_fallthru
          _
        // Predicated region
        $region41: #{tpu_custom_call.1} parent=11 // pred_check
          %p324 = pneg %p216
        $region42: #{tpu_custom_call.1} parent=11 // pred_check_branch
          %326 = sbr.rel (%p324) target = $region44
        $region43: #{tpu_custom_call.1} parent=11 // pred_region
          _
        $region44: #{tpu_custom_call.1} parent=11 // pred_fallthru
          _
      $region12: #{tpu_custom_call.1} parent=5 // pred_fallthru
        _
      %p327 = scmp.lt.s32.totalorder %s22, 2
      // Predicated region
      $region45: #{tpu_custom_call.1} parent=5 // pred_check
        %p328 = pneg %p327
      $region46: #{tpu_custom_call.1} parent=5 // pred_check_branch
        %330 = sbr.rel (%p328) target = $region48
      $region47: #{tpu_custom_call.1} parent=5 // pred_region
        // Predicated region
        $region49: #{tpu_custom_call.1} parent=47 // pred_check
          %p331 = pneg %p42
        $region50: #{tpu_custom_call.1} parent=47 // pred_check_branch
          %333 = sbr.rel (%p331) target = $region52
        $region51: #{tpu_custom_call.1} parent=47 // pred_region
          %s334 = smul.u32 4, %s22
          %p335 = scmp.lt.s32.totalorder %s334, 7
          %s336 = scalar_select %p335, %s334, 7
          %s337 = smul.addr %s336, 8
          %s338 = scalar_lea.vmem %s0, %s337
          %s339 = smul.u32 4, %s22
        $region52: #{tpu_custom_call.1} parent=47 // pred_fallthru
          _
      $region48: #{tpu_custom_call.1} parent=5 // pred_fallthru
        _
      %p340 = scmp.le.s32.totalorder 1, %s22
      %p341 = scmp.lt.s32.totalorder %s22, 3
      %p342 = pnand %p340, %p341
      %p343 = pneg %p342
      // Predicated region
      $region53: #{tpu_custom_call.1} parent=5 // pred_check
        _
      $region54: #{tpu_custom_call.1} parent=5 // pred_check_branch
        %345 = sbr.rel (%p342) target = $region56
      $region55: #{tpu_custom_call.1} parent=5 // pred_region
        %s346 = ssub.s32 %s22, 1
        // Predicated region
        $region57: #{tpu_custom_call.1} parent=55 // pred_check
          %p347 = pneg %p153
        $region58: #{tpu_custom_call.1} parent=55 // pred_check_branch
          %349 = sbr.rel (%p347) target = $region60
        $region59: #{tpu_custom_call.1} parent=55 // pred_region
          %350 = dma.done [#allocation3], 1024
        $region60: #{tpu_custom_call.1} parent=55 // pred_fallthru
          _
        // Predicated region
        $region61: #{tpu_custom_call.1} parent=55 // pred_check
          %p351 = pneg %p195
        $region62: #{tpu_custom_call.1} parent=55 // pred_check_branch
          %353 = sbr.rel (%p351) target = $region64
        $region63: #{tpu_custom_call.1} parent=55 // pred_region
          %354 = dma.done [#allocation6], 1024
        $region64: #{tpu_custom_call.1} parent=55 // pred_fallthru
          _
        %s355 = smul.u32 4, %s27
        %p356 = scmp.lt.s32.totalorder %s355, 7
        %s357 = scalar_select %p356, %s355, 7
        %s358 = smul.addr %s357, 8
        %s359 = scalar_lea.vmem %s0, %s358
        %p360 = pneg %p48
        %p361 = pneg %p45
        %p362 = pneg %p69
        %p363 = pneg %p66
        %p364 = pneg %p90
        %p365 = pneg %p87
        %p366 = pneg %p111
        %p367 = pneg %p108
        %p368 = pneg %p132
        %p369 = pneg %p129
        %p370 = pneg %p153
        %p371 = pneg %p150
        %p372 = pneg %p174
        %p373 = pneg %p171
        %p374 = pneg %p195
        %p375 = pneg %p192
        %p376 = pneg %p216
        %p377 = pneg %p213
        %p378 = pneg %p242
        %p379 = pneg %p239
        %s380 = sand.u32 %s229, 1
        %s381 = scalar_lea.sflag [#allocation4], %s380
        %s382 = sand.u32 %s229, 1
        %s383 = smul.addr %s382, 32
        %s384 = scalar_lea.vmem [#allocation7], %s383
        %p385 = pneg %p268
        %p386 = pneg %p265
        %s387 = smul.u32 4, %s27
        %p388 = scmp.lt.s32.totalorder %s387, 7
        %s389 = scalar_select %p388, %s387, 7
        %s390 = smul.addr %s389, 8
        %s391 = scalar_lea.vmem %s10, %s390
        %s392 = smul.u32 4, %s27
        %p393 = scmp.lt.s32.totalorder %s392, 7
        %s394 = scalar_select %p393, %s392, 7
        %s395 = smul.addr %s394, 8
        %s396 = scalar_lea.vmem %s0, %s395
        %s397 = smul.u32 4, %s27
        %s398 = smul.u32 4, %s27
        %s399 = smul.u32 4, %s27
        %p400 = scmp.lt.s32.totalorder %s399, 7
        %s401 = scalar_select %p400, %s399, 7
        %s402 = smul.addr %s401, 8
        %s403 = scalar_lea.vmem %s10, %s402
        %s404 = smul.u32 4, %s27
        %v405 = vld [vmem:[%s396] sm:$0xff]
        %v406 = vld [vmem:[%s396 + $0x8] sm:$0xff]
        %v407 = vld [vmem:[%s396 + $0x10] sm:$0xff]
        %v408 = vld [vmem:[%s396 + $0x18] sm:$0xff]
        %v409 = vld [vmem:[%s1] sm:$0xff]
        %v410 = vld [vmem:[%s1 + $0x8] sm:$0xff]
        %v411 = vld [vmem:[%s1 + $0x10] sm:$0xff]
        %v412 = vld [vmem:[%s1 + $0x18] sm:$0xff]
        %v413 = vld [vmem:[%s1 + $0x20] sm:$0xff]
        %v414 = vld [vmem:[%s1 + $0x28] sm:$0xff]
        %v415 = vld [vmem:[%s1 + $0x30] sm:$0xff]
        %v416 = vld [vmem:[%s1 + $0x38] sm:$0xff]
        %v417 = vld [vmem:[%s1 + $0x40] sm:$0xff]
        %v418 = vld [vmem:[%s1 + $0x48] sm:$0xff]
        %v419 = vld [vmem:[%s1 + $0x50] sm:$0xff]
        %v420 = vld [vmem:[%s1 + $0x58] sm:$0xff]
        %v421 = vld [vmem:[%s1 + $0x60] sm:$0xff]
        %v422 = vld [vmem:[%s1 + $0x68] sm:$0xff]
        %v423 = vld [vmem:[%s1 + $0x70] sm:$0xff]
        %v424 = vld [vmem:[%s1 + $0x78] sm:$0xff]
        %v425 = vld [vmem:[%s2] sm:$0x1]
        %v427 = vlaneseq
        %v428 = vshrl.u32 %v427, 7
        %v429 = vsub.s32 0, %v428
        %v430 = vrot.slane %v425, %v429
        %432 = vmatprep.subr.mxu0 0.0
        %433 = vmatpush1.msra.mxu0 %v424
        %434 = vmatprep.subr.mxu0 0.0
        %435 = vmatpush1.msra.mxu0 %v423
        %436 = vmatprep.subr.mxu0 0.0
        %437 = vmatpush1.msra.mxu0 %v422
        %438 = vmatprep.subr.mxu0 0.0
        %439 = vmatpush1.msra.mxu0 %v421
        %440 = vmatprep.subr.mxu0 0.0
        %441 = vmatpush1.msra.mxu0 %v420
        %442 = vmatprep.subr.mxu0 0.0
        %443 = vmatpush1.msra.mxu0 %v419
        %444 = vmatprep.subr.mxu0 0.0
        %445 = vmatpush1.msra.mxu0 %v418
        %446 = vmatprep.subr.mxu0 0.0
        %447 = vmatpush1.msra.mxu0 %v417
        %448 = vmatprep.subr.mxu0 0.0
        %449 = vmatpush1.msra.mxu0 %v416
        %450 = vmatprep.subr.mxu0 0.0
        %451 = vmatpush1.msra.mxu0 %v415
        %452 = vmatprep.subr.mxu0 0.0
        %453 = vmatpush1.msra.mxu0 %v414
        %454 = vmatprep.subr.mxu0 0.0
        %455 = vmatpush1.msra.mxu0 %v413
        %456 = vmatprep.subr.mxu0 0.0
        %457 = vmatpush1.msra.mxu0 %v412
        %458 = vmatprep.subr.mxu0 0.0
        %459 = vmatpush1.msra.mxu0 %v411
        %460 = vmatprep.subr.mxu0 0.0
        %461 = vmatpush1.msra.mxu0 %v410
        %462 = vmatprep.subr.mxu0 0.0
        %463 = vmatpush1.msra.mxu0 %v409
        %464 = vmatprep.subr.mxu0 0.0
        %465 = vmatpush2.msra.mxu0 0.0
        %466 = vmatprep.subr.mxu0 0.0
        %467 = vmatpush2.msra.mxu0 0.0
        %468 = vmatprep.subr.mxu0 0.0
        %469 = vmatpush2.msra.mxu0 0.0
        %470 = vmatprep.subr.mxu0 0.0
        %471 = vmatpush2.msra.mxu0 0.0
        %472 = vmatprep.subr.mxu0 0.0
        %473 = vmatpush2.msra.mxu0 0.0
        %474 = vmatprep.subr.mxu0 0.0
        %475 = vmatpush2.msra.mxu0 0.0
        %476 = vmatprep.subr.mxu0 0.0
        %477 = vmatpush2.msra.mxu0 0.0
        %478 = vmatprep.subr.mxu0 0.0
        %479 = vmatpush2.msra.mxu0 0.0
        %480 = vmatprep.subr.mxu0 0.0
        %481 = vmatpush2.msra.mxu0 0.0
        %482 = vmatprep.subr.mxu0 0.0
        %483 = vmatpush2.msra.mxu0 0.0
        %484 = vmatprep.subr.mxu0 0.0
        %485 = vmatpush2.msra.mxu0 0.0
        %486 = vmatprep.subr.mxu0 0.0
        %487 = vmatpush2.msra.mxu0 0.0
        %488 = vmatprep.subr.mxu0 0.0
        %489 = vmatpush2.msra.mxu0 0.0
        %490 = vmatprep.subr.mxu0 0.0
        %491 = vmatpush2.msra.mxu0 0.0
        %492 = vmatprep.subr.mxu0 0.0
        %493 = vmatpush2.msra.mxu0 0.0
        %494 = vmatprep.subr.mxu0 0.0
        %495 = vmatpush2.msra.mxu0 0.0
        %496 = vmatprep.mubr.f32.mxu0 0.0
        %497 = vmatmul.mubr.f32.gmra.mxu0 %v405
        %v498 = vpop.f32.mrf.mxu0
        %v499 = vadd.f32 %v430, %v498
        %v500 = vpop.f32.mrf.mxu0
        %501 = vmatprep.mubr.f32.mxu0 0.0
        %502 = vmatmul.mubr.f32.gmra.mxu0 %v406
        %v503 = vpop.f32.mrf.mxu0
        %v504 = vadd.f32 %v430, %v503
        %v505 = vpop.f32.mrf.mxu0
        %506 = vmatprep.mubr.f32.mxu0 0.0
        %507 = vmatmul.mubr.f32.gmra.mxu0 %v407
        %v508 = vpop.f32.mrf.mxu0
        %v509 = vadd.f32 %v430, %v508
        %v510 = vpop.f32.mrf.mxu0
        %511 = vmatprep.mubr.f32.mxu0 0.0
        %512 = vmatmul.mubr.f32.gmra.mxu0 %v408
        %v513 = vpop.f32.mrf.mxu0
        %v514 = vadd.f32 %v430, %v513
        %v515 = vpop.f32.mrf.mxu0
        %516 = vdwg.mxu0
        %v517 = vmax.f32 %v499, 0.0
        %v518 = vmax.f32 %v504, 0.0
        %v519 = vmax.f32 %v509, 0.0
        %v520 = vmax.f32 %v514, 0.0
        %v521 = vld [vmem:[%s3] sm:$0xff]
        %v522 = vld [vmem:[%s3 + $0x8] sm:$0xff]
        %v523 = vld [vmem:[%s3 + $0x10] sm:$0xff]
        %v524 = vld [vmem:[%s3 + $0x18] sm:$0xff]
        %v525 = vld [vmem:[%s3 + $0x20] sm:$0xff]
        %v526 = vld [vmem:[%s3 + $0x28] sm:$0xff]
        %v527 = vld [vmem:[%s3 + $0x30] sm:$0xff]
        %v528 = vld [vmem:[%s3 + $0x38] sm:$0xff]
        %v529 = vld [vmem:[%s4] sm:$0x1]
        %v531 = vlaneseq
        %v532 = vshrl.u32 %v531, 7
        %v533 = vsub.s32 0, %v532
        %v534 = vrot.slane %v529, %v533
        %vm536 = vcmask 523264
        %v538 = vsel %vm536, %v517, 0
        %v541 = vsel %vm536, %v518, 0
        %v544 = vsel %vm536, %v519, 0
        %v547 = vsel %vm536, %v520, 0
        %549 = vmatprep.subr.mxu0 0.0
        %550 = vmatpush1.msra.mxu0 0.0
        %551 = vmatprep.subr.mxu0 0.0
        %552 = vmatpush1.msra.mxu0 0.0
        %553 = vmatprep.subr.mxu0 0.0
        %554 = vmatpush1.msra.mxu0 0.0
        %555 = vmatprep.subr.mxu0 0.0
        %556 = vmatpush1.msra.mxu0 0.0
        %557 = vmatprep.subr.mxu0 0.0
        %558 = vmatpush1.msra.mxu0 0.0
        %559 = vmatprep.subr.mxu0 0.0
        %560 = vmatpush1.msra.mxu0 0.0
        %561 = vmatprep.subr.mxu0 0.0
        %562 = vmatpush1.msra.mxu0 0.0
        %563 = vmatprep.subr.mxu0 0.0
        %564 = vmatpush1.msra.mxu0 0.0
        %565 = vmatprep.subr.mxu0 0.0
        %566 = vmatpush1.msra.mxu0 %v528
        %567 = vmatprep.subr.mxu0 0.0
        %568 = vmatpush1.msra.mxu0 %v527
        %569 = vmatprep.subr.mxu0 0.0
        %570 = vmatpush1.msra.mxu0 %v526
        %571 = vmatprep.subr.mxu0 0.0
        %572 = vmatpush1.msra.mxu0 %v525
        %573 = vmatprep.subr.mxu0 0.0
        %574 = vmatpush1.msra.mxu0 %v524
        %575 = vmatprep.subr.mxu0 0.0
        %576 = vmatpush1.msra.mxu0 %v523
        %577 = vmatprep.subr.mxu0 0.0
        %578 = vmatpush1.msra.mxu0 %v522
        %579 = vmatprep.subr.mxu0 0.0
        %580 = vmatpush1.msra.mxu0 %v521
        %581 = vmatprep.subr.mxu0 0.0
        %582 = vmatpush2.msra.mxu0 0.0
        %583 = vmatprep.subr.mxu0 0.0
        %584 = vmatpush2.msra.mxu0 0.0
        %585 = vmatprep.subr.mxu0 0.0
        %586 = vmatpush2.msra.mxu0 0.0
        %587 = vmatprep.subr.mxu0 0.0
        %588 = vmatpush2.msra.mxu0 0.0
        %589 = vmatprep.subr.mxu0 0.0
        %590 = vmatpush2.msra.mxu0 0.0
        %591 = vmatprep.subr.mxu0 0.0
        %592 = vmatpush2.msra.mxu0 0.0
        %593 = vmatprep.subr.mxu0 0.0
        %594 = vmatpush2.msra.mxu0 0.0
        %595 = vmatprep.subr.mxu0 0.0
        %596 = vmatpush2.msra.mxu0 0.0
        %597 = vmatprep.subr.mxu0 0.0
        %598 = vmatpush2.msra.mxu0 0.0
        %599 = vmatprep.subr.mxu0 0.0
        %600 = vmatpush2.msra.mxu0 0.0
        %601 = vmatprep.subr.mxu0 0.0
        %602 = vmatpush2.msra.mxu0 0.0
        %603 = vmatprep.subr.mxu0 0.0
        %604 = vmatpush2.msra.mxu0 0.0
        %605 = vmatprep.subr.mxu0 0.0
        %606 = vmatpush2.msra.mxu0 0.0
        %607 = vmatprep.subr.mxu0 0.0
        %608 = vmatpush2.msra.mxu0 0.0
        %609 = vmatprep.subr.mxu0 0.0
        %610 = vmatpush2.msra.mxu0 0.0
        %611 = vmatprep.subr.mxu0 0.0
        %612 = vmatpush2.msra.mxu0 0.0
        %613 = vmatprep.mubr.f32.mxu0 0.0
        %614 = vmatmul.mubr.f32.gmra.mxu0 %v538
        %v615 = vpop.f32.mrf.mxu0
        %v616 = vadd.f32 %v534, %v615
        %v617 = vpop.f32.mrf.mxu0
        %618 = vmatprep.mubr.f32.mxu0 0.0
        %619 = vmatmul.mubr.f32.gmra.mxu0 %v541
        %v620 = vpop.f32.mrf.mxu0
        %v621 = vadd.f32 %v534, %v620
        %v622 = vpop.f32.mrf.mxu0
        %623 = vmatprep.mubr.f32.mxu0 0.0
        %624 = vmatmul.mubr.f32.gmra.mxu0 %v544
        %v625 = vpop.f32.mrf.mxu0
        %v626 = vadd.f32 %v534, %v625
        %v627 = vpop.f32.mrf.mxu0
        %628 = vmatprep.mubr.f32.mxu0 0.0
        %629 = vmatmul.mubr.f32.gmra.mxu0 %v547
        %v630 = vpop.f32.mrf.mxu0
        %v631 = vadd.f32 %v534, %v630
        %v632 = vpop.f32.mrf.mxu0
        %633 = vdwg.mxu0
        %v634 = vmax.f32 %v616, 0.0
        %v635 = vmax.f32 %v621, 0.0
        %v636 = vmax.f32 %v626, 0.0
        %v637 = vmax.f32 %v631, 0.0
        %s638 = scalar_lea.vmem %s3, 64
        %v639 = vld [vmem:[%s638] sm:$0xff]
        %v640 = vld [vmem:[%s638 + $0x8] sm:$0xff]
        %v641 = vld [vmem:[%s638 + $0x10] sm:$0xff]
        %v642 = vld [vmem:[%s638 + $0x18] sm:$0xff]
        %v643 = vld [vmem:[%s638 + $0x20] sm:$0xff]
        %v644 = vld [vmem:[%s638 + $0x28] sm:$0xff]
        %v645 = vld [vmem:[%s638 + $0x30] sm:$0xff]
        %v646 = vld [vmem:[%s638 + $0x38] sm:$0xff]
        %s647 = scalar_lea.vmem %s4, 1
        %v648 = vld [vmem:[%s647] sm:$0x1]
        %v650 = vlaneseq
        %v651 = vshrl.u32 %v650, 7
        %v652 = vsub.s32 0, %v651
        %v653 = vrot.slane %v648, %v652
        %v656 = vsel %vm536, %v634, 0
        %v659 = vsel %vm536, %v635, 0
        %v662 = vsel %vm536, %v636, 0
        %v665 = vsel %vm536, %v637, 0
        %667 = vmatprep.subr.mxu0 0.0
        %668 = vmatpush1.msra.mxu0 0.0
        %669 = vmatprep.subr.mxu0 0.0
        %670 = vmatpush1.msra.mxu0 0.0
        %671 = vmatprep.subr.mxu0 0.0
        %672 = vmatpush1.msra.mxu0 0.0
        %673 = vmatprep.subr.mxu0 0.0
        %674 = vmatpush1.msra.mxu0 0.0
        %675 = vmatprep.subr.mxu0 0.0
        %676 = vmatpush1.msra.mxu0 0.0
        %677 = vmatprep.subr.mxu0 0.0
        %678 = vmatpush1.msra.mxu0 0.0
        %679 = vmatprep.subr.mxu0 0.0
        %680 = vmatpush1.msra.mxu0 0.0
        %681 = vmatprep.subr.mxu0 0.0
        %682 = vmatpush1.msra.mxu0 0.0
        %683 = vmatprep.subr.mxu0 0.0
        %684 = vmatpush1.msra.mxu0 %v646
        %685 = vmatprep.subr.mxu0 0.0
        %686 = vmatpush1.msra.mxu0 %v645
        %687 = vmatprep.subr.mxu0 0.0
        %688 = vmatpush1.msra.mxu0 %v644
        %689 = vmatprep.subr.mxu0 0.0
        %690 = vmatpush1.msra.mxu0 %v643
        %691 = vmatprep.subr.mxu0 0.0
        %692 = vmatpush1.msra.mxu0 %v642
        %693 = vmatprep.subr.mxu0 0.0
        %694 = vmatpush1.msra.mxu0 %v641
        %695 = vmatprep.subr.mxu0 0.0
        %696 = vmatpush1.msra.mxu0 %v640
        %697 = vmatprep.subr.mxu0 0.0
        %698 = vmatpush1.msra.mxu0 %v639
        %699 = vmatprep.subr.mxu0 0.0
        %700 = vmatpush2.msra.mxu0 0.0
        %701 = vmatprep.subr.mxu0 0.0
        %702 = vmatpush2.msra.mxu0 0.0
        %703 = vmatprep.subr.mxu0 0.0
        %704 = vmatpush2.msra.mxu0 0.0
        %705 = vmatprep.subr.mxu0 0.0
        %706 = vmatpush2.msra.mxu0 0.0
        %707 = vmatprep.subr.mxu0 0.0
        %708 = vmatpush2.msra.mxu0 0.0
        %709 = vmatprep.subr.mxu0 0.0
        %710 = vmatpush2.msra.mxu0 0.0
        %711 = vmatprep.subr.mxu0 0.0
        %712 = vmatpush2.msra.mxu0 0.0
        %713 = vmatprep.subr.mxu0 0.0
        %714 = vmatpush2.msra.mxu0 0.0
        %715 = vmatprep.subr.mxu0 0.0
        %716 = vmatpush2.msra.mxu0 0.0
        %717 = vmatprep.subr.mxu0 0.0
        %718 = vmatpush2.msra.mxu0 0.0
        %719 = vmatprep.subr.mxu0 0.0
        %720 = vmatpush2.msra.mxu0 0.0
        %721 = vmatprep.subr.mxu0 0.0
        %722 = vmatpush2.msra.mxu0 0.0
        %723 = vmatprep.subr.mxu0 0.0
        %724 = vmatpush2.msra.mxu0 0.0
        %725 = vmatprep.subr.mxu0 0.0
        %726 = vmatpush2.msra.mxu0 0.0
        %727 = vmatprep.subr.mxu0 0.0
        %728 = vmatpush2.msra.mxu0 0.0
        %729 = vmatprep.subr.mxu0 0.0
        %730 = vmatpush2.msra.mxu0 0.0
        %731 = vmatprep.mubr.f32.mxu0 0.0
        %732 = vmatmul.mubr.f32.gmra.mxu0 %v656
        %v733 = vpop.f32.mrf.mxu0
        %v734 = vadd.f32 %v653, %v733
        %v735 = vpop.f32.mrf.mxu0
        %736 = vmatprep.mubr.f32.mxu0 0.0
        %737 = vmatmul.mubr.f32.gmra.mxu0 %v659
        %v738 = vpop.f32.mrf.mxu0
        %v739 = vadd.f32 %v653, %v738
        %v740 = vpop.f32.mrf.mxu0
        %741 = vmatprep.mubr.f32.mxu0 0.0
        %742 = vmatmul.mubr.f32.gmra.mxu0 %v662
        %v743 = vpop.f32.mrf.mxu0
        %v744 = vadd.f32 %v653, %v743
        %v745 = vpop.f32.mrf.mxu0
        %746 = vmatprep.mubr.f32.mxu0 0.0
        %747 = vmatmul.mubr.f32.gmra.mxu0 %v665
        %v748 = vpop.f32.mrf.mxu0
        %v749 = vadd.f32 %v653, %v748
        %v750 = vpop.f32.mrf.mxu0
        %751 = vdwg.mxu0
        %v752 = vmax.f32 %v734, 0.0
        %v753 = vmax.f32 %v739, 0.0
        %v754 = vmax.f32 %v744, 0.0
        %v755 = vmax.f32 %v749, 0.0
        %v756 = vld [vmem:[#allocation2] sm:$0xff]
        %v757 = vld [vmem:[#allocation2 + $0x8] sm:$0xff]
        %v758 = vld [vmem:[#allocation2 + $0x10] sm:$0xff]
        %v759 = vld [vmem:[#allocation2 + $0x18] sm:$0xff]
        %v760 = vld [vmem:[#allocation2 + $0x20] sm:$0xff]
        %v761 = vld [vmem:[#allocation2 + $0x28] sm:$0xff]
        %v762 = vld [vmem:[#allocation2 + $0x30] sm:$0xff]
        %v763 = vld [vmem:[#allocation2 + $0x38] sm:$0xff]
        %v764 = vld [vmem:[%s6] sm:$0x1]
        %v766 = vlaneseq
        %v767 = vshrl.u32 %v766, 7
        %v768 = vsub.s32 0, %v767
        %v769 = vrot.slane %v764, %v768
        %v772 = vsel %vm536, %v752, 0
        %v775 = vsel %vm536, %v753, 0
        %v778 = vsel %vm536, %v754, 0
        %v781 = vsel %vm536, %v755, 0
        %783 = vmatprep.subr.mxu0 0.0
        %784 = vmatpush1.msra.mxu0 0.0
        %785 = vmatprep.subr.mxu0 0.0
        %786 = vmatpush1.msra.mxu0 0.0
        %787 = vmatprep.subr.mxu0 0.0
        %788 = vmatpush1.msra.mxu0 0.0
        %789 = vmatprep.subr.mxu0 0.0
        %790 = vmatpush1.msra.mxu0 0.0
        %791 = vmatprep.subr.mxu0 0.0
        %792 = vmatpush1.msra.mxu0 0.0
        %793 = vmatprep.subr.mxu0 0.0
        %794 = vmatpush1.msra.mxu0 0.0
        %795 = vmatprep.subr.mxu0 0.0
        %796 = vmatpush1.msra.mxu0 0.0
        %797 = vmatprep.subr.mxu0 0.0
        %798 = vmatpush1.msra.mxu0 0.0
        %799 = vmatprep.subr.mxu0 0.0
        %800 = vmatpush1.msra.mxu0 %v763
        %801 = vmatprep.subr.mxu0 0.0
        %802 = vmatpush1.msra.mxu0 %v762
        %803 = vmatprep.subr.mxu0 0.0
        %804 = vmatpush1.msra.mxu0 %v761
        %805 = vmatprep.subr.mxu0 0.0
        %806 = vmatpush1.msra.mxu0 %v760
        %807 = vmatprep.subr.mxu0 0.0
        %808 = vmatpush1.msra.mxu0 %v759
        %809 = vmatprep.subr.mxu0 0.0
        %810 = vmatpush1.msra.mxu0 %v758
        %811 = vmatprep.subr.mxu0 0.0
        %812 = vmatpush1.msra.mxu0 %v757
        %813 = vmatprep.subr.mxu0 0.0
        %814 = vmatpush1.msra.mxu0 %v756
        %815 = vmatprep.subr.mxu0 0.0
        %816 = vmatpush2.msra.mxu0 0.0
        %817 = vmatprep.subr.mxu0 0.0
        %818 = vmatpush2.msra.mxu0 0.0
        %819 = vmatprep.subr.mxu0 0.0
        %820 = vmatpush2.msra.mxu0 0.0
        %821 = vmatprep.subr.mxu0 0.0
        %822 = vmatpush2.msra.mxu0 0.0
        %823 = vmatprep.subr.mxu0 0.0
        %824 = vmatpush2.msra.mxu0 0.0
        %825 = vmatprep.subr.mxu0 0.0
        %826 = vmatpush2.msra.mxu0 0.0
        %827 = vmatprep.subr.mxu0 0.0
        %828 = vmatpush2.msra.mxu0 0.0
        %829 = vmatprep.subr.mxu0 0.0
        %830 = vmatpush2.msra.mxu0 0.0
        %831 = vmatprep.subr.mxu0 0.0
        %832 = vmatpush2.msra.mxu0 0.0
        %833 = vmatprep.subr.mxu0 0.0
        %834 = vmatpush2.msra.mxu0 0.0
        %835 = vmatprep.subr.mxu0 0.0
        %836 = vmatpush2.msra.mxu0 0.0
        %837 = vmatprep.subr.mxu0 0.0
        %838 = vmatpush2.msra.mxu0 0.0
        %839 = vmatprep.subr.mxu0 0.0
        %840 = vmatpush2.msra.mxu0 0.0
        %841 = vmatprep.subr.mxu0 0.0
        %842 = vmatpush2.msra.mxu0 0.0
        %843 = vmatprep.subr.mxu0 0.0
        %844 = vmatpush2.msra.mxu0 0.0
        %845 = vmatprep.subr.mxu0 0.0
        %846 = vmatpush2.msra.mxu0 0.0
        %847 = vmatprep.mubr.f32.mxu0 0.0
        %848 = vmatmul.mubr.f32.gmra.mxu0 %v772
        %v849 = vpop.f32.mrf.mxu0
        %v850 = vadd.f32 %v769, %v849
        %v851 = vpop.f32.mrf.mxu0
        %852 = vmatprep.mubr.f32.mxu0 0.0
        %853 = vmatmul.mubr.f32.gmra.mxu0 %v775
        %v854 = vpop.f32.mrf.mxu0
        %v855 = vadd.f32 %v769, %v854
        %v856 = vpop.f32.mrf.mxu0
        %857 = vmatprep.mubr.f32.mxu0 0.0
        %858 = vmatmul.mubr.f32.gmra.mxu0 %v778
        %v859 = vpop.f32.mrf.mxu0
        %v860 = vadd.f32 %v769, %v859
        %v861 = vpop.f32.mrf.mxu0
        %862 = vmatprep.mubr.f32.mxu0 0.0
        %863 = vmatmul.mubr.f32.gmra.mxu0 %v781
        %v864 = vpop.f32.mrf.mxu0
        %v865 = vadd.f32 %v769, %v864
        %v866 = vpop.f32.mrf.mxu0
        %867 = vdwg.mxu0
        %v868 = vld [vmem:[#allocation5] sm:$0xff]
        %v869 = vld [vmem:[#allocation5 + $0x8] sm:$0xff]
        %v870 = vld [vmem:[#allocation5 + $0x10] sm:$0xff]
        %v871 = vld [vmem:[#allocation5 + $0x18] sm:$0xff]
        %v872 = vld [vmem:[#allocation5 + $0x20] sm:$0xff]
        %v873 = vld [vmem:[#allocation5 + $0x28] sm:$0xff]
        %v874 = vld [vmem:[#allocation5 + $0x30] sm:$0xff]
        %v875 = vld [vmem:[#allocation5 + $0x38] sm:$0xff]
        %v876 = vld [vmem:[%s8] sm:$0x1]
        %v878 = vlaneseq
        %v879 = vshrl.u32 %v878, 7
        %v880 = vsub.s32 0, %v879
        %v881 = vrot.slane %v876, %v880
        %883 = vmatprep.subr.mxu0 0.0
        %884 = vmatpush1.msra.mxu0 0.0
        %885 = vmatprep.subr.mxu0 0.0
        %886 = vmatpush1.msra.mxu0 0.0
        %887 = vmatprep.subr.mxu0 0.0
        %888 = vmatpush1.msra.mxu0 0.0
        %889 = vmatprep.subr.mxu0 0.0
        %890 = vmatpush1.msra.mxu0 0.0
        %891 = vmatprep.subr.mxu0 0.0
        %892 = vmatpush1.msra.mxu0 0.0
        %893 = vmatprep.subr.mxu0 0.0
        %894 = vmatpush1.msra.mxu0 0.0
        %895 = vmatprep.subr.mxu0 0.0
        %896 = vmatpush1.msra.mxu0 0.0
        %897 = vmatprep.subr.mxu0 0.0
        %898 = vmatpush1.msra.mxu0 0.0
        %899 = vmatprep.subr.mxu0 0.0
        %900 = vmatpush1.msra.mxu0 %v875
        %901 = vmatprep.subr.mxu0 0.0
        %902 = vmatpush1.msra.mxu0 %v874
        %903 = vmatprep.subr.mxu0 0.0
        %904 = vmatpush1.msra.mxu0 %v873
        %905 = vmatprep.subr.mxu0 0.0
        %906 = vmatpush1.msra.mxu0 %v872
        %907 = vmatprep.subr.mxu0 0.0
        %908 = vmatpush1.msra.mxu0 %v871
        %909 = vmatprep.subr.mxu0 0.0
        %910 = vmatpush1.msra.mxu0 %v870
        %911 = vmatprep.subr.mxu0 0.0
        %912 = vmatpush1.msra.mxu0 %v869
        %913 = vmatprep.subr.mxu0 0.0
        %914 = vmatpush1.msra.mxu0 %v868
        %915 = vmatprep.subr.mxu0 0.0
        %916 = vmatpush2.msra.mxu0 0.0
        %917 = vmatprep.subr.mxu0 0.0
        %918 = vmatpush2.msra.mxu0 0.0
        %919 = vmatprep.subr.mxu0 0.0
        %920 = vmatpush2.msra.mxu0 0.0
        %921 = vmatprep.subr.mxu0 0.0
        %922 = vmatpush2.msra.mxu0 0.0
        %923 = vmatprep.subr.mxu0 0.0
        %924 = vmatpush2.msra.mxu0 0.0
        %925 = vmatprep.subr.mxu0 0.0
        %926 = vmatpush2.msra.mxu0 0.0
        %927 = vmatprep.subr.mxu0 0.0
        %928 = vmatpush2.msra.mxu0 0.0
        %929 = vmatprep.subr.mxu0 0.0
        %930 = vmatpush2.msra.mxu0 0.0
        %931 = vmatprep.subr.mxu0 0.0
        %932 = vmatpush2.msra.mxu0 0.0
        %933 = vmatprep.subr.mxu0 0.0
        %934 = vmatpush2.msra.mxu0 0.0
        %935 = vmatprep.subr.mxu0 0.0
        %936 = vmatpush2.msra.mxu0 0.0
        %937 = vmatprep.subr.mxu0 0.0
        %938 = vmatpush2.msra.mxu0 0.0
        %939 = vmatprep.subr.mxu0 0.0
        %940 = vmatpush2.msra.mxu0 0.0
        %941 = vmatprep.subr.mxu0 0.0
        %942 = vmatpush2.msra.mxu0 0.0
        %943 = vmatprep.subr.mxu0 0.0
        %944 = vmatpush2.msra.mxu0 0.0
        %945 = vmatprep.subr.mxu0 0.0
        %946 = vmatpush2.msra.mxu0 0.0
        %947 = vmatprep.mubr.f32.mxu0 0.0
        %948 = vmatmul.mubr.f32.gmra.mxu0 %v772
        %v949 = vpop.f32.mrf.mxu0
        %v950 = vadd.f32 %v881, %v949
        %v951 = vpop.f32.mrf.mxu0
        %952 = vmatprep.mubr.f32.mxu0 0.0
        %953 = vmatmul.mubr.f32.gmra.mxu0 %v775
        %v954 = vpop.f32.mrf.mxu0
        %v955 = vadd.f32 %v881, %v954
        %v956 = vpop.f32.mrf.mxu0
        %957 = vmatprep.mubr.f32.mxu0 0.0
        %958 = vmatmul.mubr.f32.gmra.mxu0 %v778
        %v959 = vpop.f32.mrf.mxu0
        %v960 = vadd.f32 %v881, %v959
        %v961 = vpop.f32.mrf.mxu0
        %962 = vmatprep.mubr.f32.mxu0 0.0
        %963 = vmatmul.mubr.f32.gmra.mxu0 %v781
        %v964 = vpop.f32.mrf.mxu0
        %v965 = vadd.f32 %v881, %v964
        %v966 = vpop.f32.mrf.mxu0
        %967 = vdwg.mxu0
        %v968 = vmul.f32 %v950, 1.442695
        %v969 = vpow.pop %v968
        %v970 = vmul.f32 %v955, 1.442695
        %v971 = vpow.pop %v970
        %v972 = vmul.f32 %v960, 1.442695
        %v973 = vpow.pop %v972
        %v974 = vmul.f32 %v965, 1.442695
        %v975 = vpow.pop %v974
        %v976 = vmul.f32 %v405, %v969
        %v977 = vmul.f32 %v406, %v971
        %v978 = vmul.f32 %v407, %v973
        %v979 = vmul.f32 %v408, %v975
        %v980 = vadd.f32 %v976, %v850
        %v981 = vadd.f32 %v977, %v855
        %v982 = vadd.f32 %v978, %v860
        %v983 = vadd.f32 %v979, %v865
        %984 = vst [vmem:[%s384] sm:$0xff] %v980
        %985 = vst [vmem:[%s384 + $0x8] sm:$0xff] %v981
        %986 = vst [vmem:[%s384 + $0x10] sm:$0xff] %v982
        %987 = vst [vmem:[%s384 + $0x18] sm:$0xff] %v983
        %988 = vadd.xlane.f32.xlu0 %v950
        %v989 = vpop.xlane.xlu0 %988
        %990 = vadd.xlane.f32.xlu0 %v955
        %v991 = vpop.xlane.xlu0 %990
        %992 = vadd.xlane.f32.xlu0 %v960
        %v993 = vpop.xlane.xlu0 %992
        %994 = vadd.xlane.f32.xlu0 %v965
        %v995 = vpop.xlane.xlu0 %994
        %vm996 = vcmask 64512
        %997 = vst.msk [vmem:[%s403] sm:$0xff] %vm996, %v989
        %998 = vst.msk [vmem:[%s403 + $0x8] sm:$0xff] %vm996, %v991
        %999 = vst.msk [vmem:[%s403 + $0x10] sm:$0xff] %vm996, %v993
        %1000 = vst.msk [vmem:[%s403 + $0x18] sm:$0xff] %vm996, %v995
        %s1001 = sand.u32 %s229, 1
        %s1002 = scalar_lea.sflag [#allocation4], %s1001
        %s1003 = sand.u32 %s229, 1
        %s1004 = smul.addr %s1003, 32
        %s1005 = scalar_lea.vmem [#allocation7], %s1004
        %s1006 = smul.u32 4, %s27
        %p1007 = scmp.lt.s32.totalorder %s1006, 7
        %s1008 = scalar_select %p1007, %s1006, 7
        %s1009 = smul.addr %s1008, 8
        %s1010 = scalar_lea.vmem %s10, %s1009
        // Predicated region
        $region65: #{tpu_custom_call.1} parent=55 // pred_check
          %p1011 = pneg %p239
        $region66: #{tpu_custom_call.1} parent=55 // pred_check_branch
          %1013 = sbr.rel (%p1011) target = $region68
        $region67: #{tpu_custom_call.1} parent=55 // pred_region
          %s1014 = smul.u32 4, %s27
          %s1016 = ssub.s32 512, 512
          %1017 = vsyncadd %s1002, %s1016
          %s1018 = smul.addr %s1014, 128
          %s1019 = scalar_lea.hbm %s9, %s1018
          %s1020 = sshll.u32 %s1005, 4
          %s1021 = int_to_ptr.vmem [resolvable:$true] %s1020
          %1026 = dma.vmem_to_hbm [thread:$0]  %s1021, 512, %s1019, %s1002, 128, 128, 8
        $region68: #{tpu_custom_call.1} parent=55 // pred_fallthru
          _
        // Predicated region
        $region69: #{tpu_custom_call.1} parent=55 // pred_check
          %p1027 = pneg %p265
        $region70: #{tpu_custom_call.1} parent=55 // pred_check_branch
          %1029 = sbr.rel (%p1027) target = $region72
        $region71: #{tpu_custom_call.1} parent=55 // pred_region
          %s1030 = smul.u32 4, %s27
        $region72: #{tpu_custom_call.1} parent=55 // pred_fallthru
          _
      $region56: #{tpu_custom_call.1} parent=5 // pred_fallthru
        _
      %p1031 = scmp.le.s32.totalorder 2, %s22
      // Predicated region
      $region73: #{tpu_custom_call.1} parent=5 // pred_check
        %p1032 = pneg %p1031
      $region74: #{tpu_custom_call.1} parent=5 // pred_check_branch
        %1034 = sbr.rel (%p1032) target = $region76
      $region75: #{tpu_custom_call.1} parent=5 // pred_region
        %s1035 = ssub.s32 %s22, 2
        // Predicated region
        $region77: #{tpu_custom_call.1} parent=75 // pred_check
          %p1036 = pneg %p245
        $region78: #{tpu_custom_call.1} parent=75 // pred_check_branch
          %1038 = sbr.rel (%p1036) target = $region80
        $region79: #{tpu_custom_call.1} parent=75 // pred_region
          %s1039 = sand.u32 %s230, 1
          %s1040 = scalar_lea.sflag [#allocation4], %s1039
          %s1041 = sand.u32 %s230, 1
          %s1042 = smul.addr %s1041, 32
          %s1043 = scalar_lea.vmem [#allocation7], %s1042
          %1044 = dma.done %s1040, 512
        $region80: #{tpu_custom_call.1} parent=75 // pred_fallthru
          _
        // Predicated region
        $region81: #{tpu_custom_call.1} parent=75 // pred_check
          %p1045 = pneg %p271
        $region82: #{tpu_custom_call.1} parent=75 // pred_check_branch
          %1047 = sbr.rel (%p1045) target = $region84
        $region83: #{tpu_custom_call.1} parent=75 // pred_region
          %s1048 = smul.u32 4, %s28
          %p1049 = scmp.lt.s32.totalorder %s1048, 7
          %s1050 = scalar_select %p1049, %s1048, 7
          %s1051 = smul.addr %s1050, 8
          %s1052 = scalar_lea.vmem %s10, %s1051
        $region84: #{tpu_custom_call.1} parent=75 // pred_fallthru
          _
      $region76: #{tpu_custom_call.1} parent=5 // pred_fallthru
        _
    $region6: #{tpu_custom_call.1} parent=1 // loop_footer
      %s26 = sadd.s32 1, %s22
    $region7: #{tpu_custom_call.1} parent=1 // loop_footer_branch
      %21 = sbr.rel target = $region3
    $region8: #{tpu_custom_call.1} parent=1 // loop_exit
      _
    %1053 = vsyncpa [#allocation3], 1
    %s1054 = scalar_lea.sflag [#allocation3], 1
    %1055 = vsyncpa %s1054, 1
    %1056 = vsyncpa [#allocation6], 1
    %1057 = vsyncpa [#allocation4], 1
    %s1058 = scalar_lea.sflag [#allocation4], 1
    %1059 = vsyncpa %s1058, 1

</llo_original>
